<compile_context>
chip_gen: v5e
topology: v5e:2x2
jax: 0.10.0
libtpu: 0.0.40
codegen_flags: <defaults>
</compile_context>

<pallas_src>
import functools

import jax
import jax.numpy as jnp
from jax.experimental import pallas as pl
from jax.experimental.pallas import tpu as pltpu

N_STEPS = 16
NUM_UNITS = 128
IN_DIM = 2


def _round_up(n, m):
    return ((n + m - 1) // m) * m


def mlp_diffusion_kernel(
    x_ref, t_ref,
    w1_ref, tab_ref, w2_ref, w3_ref, w4_ref, b4_ref,
    out_ref,
):
    x = x_ref[...]                                    # (bb, 2)  f32
    t = t_ref[...]                                    # (bb, 1)  i32
    bb = x.shape[0]

    # Fused in-kernel embedding gather for all three blocks:
    #   one-hot(t, 16) @ [tab1 | tab2 | tab3]  ->  (bb, 384)
    # Tables are VMEM-resident, have the matching Linear biases folded in, and are
    # stored in the weight dtype so this runs as a single native (bf16) MXU matmul.
    steps = jax.lax.broadcasted_iota(jnp.int32, (bb, N_STEPS), 1)
    onehot = (steps == t).astype(tab_ref.dtype)       # (bb, 16)
    g = jnp.dot(onehot, tab_ref[...],
                preferred_element_type=jnp.float32)   # (bb, 384) f32
    e1 = g[:, 0 * NUM_UNITS:1 * NUM_UNITS]
    e2 = g[:, 1 * NUM_UNITS:2 * NUM_UNITS]
    e3 = g[:, 2 * NUM_UNITS:3 * NUM_UNITS]

    # Block 0: Linear(2 -> 128) on the VPU (K=2 would starve the MXU),
    #          + step embedding (+ folded bias) + ReLU.  All f32 (v5e-safe).
    w1 = w1_ref[...]                                  # (2, 128) f32
    h = x[:, 0:1] * w1[0:1, :] + x[:, 1:2] * w1[1:2, :] + e1
    h = jnp.maximum(h, 0.0)

    # Block 1: Linear(128 -> 128) + step embedding + ReLU (MXU, f32 accumulate).
    h = jnp.dot(h.astype(w2_ref.dtype), w2_ref[...],
                preferred_element_type=jnp.float32) + e2
    h = jnp.maximum(h, 0.0)

    # Block 2: Linear(128 -> 128) + step embedding + ReLU.
    h = jnp.dot(h.astype(w3_ref.dtype), w3_ref[...],
                preferred_element_type=jnp.float32) + e3
    h = jnp.maximum(h, 0.0)

    # Head: Linear(128 -> 2).  2-lane output store: masked vst, absorbed by
    # store-slot slack -- no more 128-lane padded HBM writeback.
    out_ref[...] = (
        jnp.dot(h.astype(w4_ref.dtype), w4_ref[...],
                preferred_element_type=jnp.float32) + b4_ref[...]
    )


@functools.partial(jax.jit, static_argnames=("block_b", "weight_dtype"))
def mlp_diffusion_forward(x_0, t, params, *, block_b=4096, weight_dtype=jnp.bfloat16):
    """x_0: (B, 2) float32; t: (B,) int; params: dict of weights/biases/embeddings.

    weight_dtype=jnp.bfloat16 (default): fast MXU path, f32 accumulation.
    weight_dtype=jnp.float32: exact path (matches the reference at 1e-5).
    """
    B = x_0.shape[0]

    # Batch tile: large for real batches, no waste for tiny ones.  Batch is
    # zero-padded to a multiple of the tile (t pads to the valid index 0; padded
    # rows are discarded after the call).
    b8 = _round_up(B, 8)
    bb = min(block_b, b8)
    # Give v7x's two TensorCores at least two grid steps for non-tiny batches
    # (no-op on single-TC v5e/v6e).
    if bb == b8 and b8 >= 1024:
        bb = _round_up((b8 + 1) // 2, 8)
    B_pad = _round_up(B, bb)

    if B_pad != B:
        x_0 = jnp.pad(x_0, ((0, B_pad - B), (0, 0)))
        t = jnp.pad(t, (0, B_pad - B))
    x_0 = x_0.astype(jnp.float32)
    t2 = t.reshape(B_pad, 1).astype(jnp.int32)

    # Fold Linear biases b1..b3 into the embedding tables and fuse them into one
    # (16, 384) table:  x@W + b + emb[t]  ==  x@W + (emb + b)[t].
    tab = jnp.concatenate(
        [params["emb1"] + params["b1"][None, :],
         params["emb2"] + params["b2"][None, :],
         params["emb3"] + params["b3"][None, :]], axis=1
    ).astype(weight_dtype)                                   # (16, 384)

    # MXU weights in the selected dtype; VPU first-layer weight and bias stay f32.
    w1 = params["w1"].astype(jnp.float32)                    # (2, 128)
    w2 = params["w2"].astype(weight_dtype)                   # (128, 128)
    w3 = params["w3"].astype(weight_dtype)                   # (128, 128)
    w4 = params["w4"].astype(weight_dtype)                   # (128, 2)
    b4 = params["b4"].reshape(1, IN_DIM).astype(jnp.float32)  # (1, 2)

    grid = (B_pad // bb,)

    batch_spec = lambda shape: pl.BlockSpec(shape, lambda i: (i, 0))
    # Constant block index across the grid -> stays resident in VMEM (no re-DMA).
    full_spec = lambda shape: pl.BlockSpec(shape, lambda i: (0, 0))

    out = pl.pallas_call(
        mlp_diffusion_kernel,
        out_shape=jax.ShapeDtypeStruct((B_pad, IN_DIM), jnp.float32),
        grid_spec=pltpu.PrefetchScalarGridSpec(
            num_scalar_prefetch=0,
            grid=grid,
            in_specs=[
                batch_spec((bb, IN_DIM)),                 # x
                batch_spec((bb, 1)),                      # t
                full_spec((IN_DIM, NUM_UNITS)),           # w1 (f32, VPU path)
                full_spec((N_STEPS, 3 * NUM_UNITS)),      # [tab1|tab2|tab3] (+biases)
                full_spec((NUM_UNITS, NUM_UNITS)),        # w2
                full_spec((NUM_UNITS, NUM_UNITS)),        # w3
                full_spec((NUM_UNITS, IN_DIM)),           # w4
                full_spec((1, IN_DIM)),                   # b4
            ],
            out_specs=pl.BlockSpec((bb, IN_DIM), lambda i: (i, 0)),
        ),
        compiler_params=pltpu.CompilerParams(
            dimension_semantics=("parallel",),
        ),
    )(x_0, t2, w1, tab, w2, w3, w4, b4)

    return out[:B]


def init_params(key):
    """Deterministic synthetic parameters matching the PyTorch module shapes.

    PyTorch stores Linear weights as (out, in); we store the transpose (in, out).
    """
    ks = jax.random.split(key, 11)
    scale = 0.1
    return {
        "w1": scale * jax.random.normal(ks[0], (IN_DIM, NUM_UNITS), jnp.float32),
        "b1": scale * jax.random.normal(ks[1], (NUM_UNITS,), jnp.float32),
        "w2": scale * jax.random.normal(ks[2], (NUM_UNITS, NUM_UNITS), jnp.float32),
        "b2": scale * jax.random.normal(ks[3], (NUM_UNITS,), jnp.float32),
        "w3": scale * jax.random.normal(ks[4], (NUM_UNITS, NUM_UNITS), jnp.float32),
        "b3": scale * jax.random.normal(ks[5], (NUM_UNITS,), jnp.float32),
        "w4": scale * jax.random.normal(ks[6], (NUM_UNITS, IN_DIM), jnp.float32),
        "b4": scale * jax.random.normal(ks[7], (IN_DIM,), jnp.float32),
        "emb1": scale * jax.random.normal(ks[8], (N_STEPS, NUM_UNITS), jnp.float32),
        "emb2": scale * jax.random.normal(ks[9], (N_STEPS, NUM_UNITS), jnp.float32),
        "emb3": scale * jax.random.normal(ks[10], (N_STEPS, NUM_UNITS), jnp.float32),
    }


def reference_forward(x_0, t, p):
    """Pure-JAX reference mirroring the PyTorch forward exactly."""
    x = x_0
    embs = (p["emb1"], p["emb2"], p["emb3"])
    ws = (p["w1"], p["w2"], p["w3"])
    bs = (p["b1"], p["b2"], p["b3"])
    for i in range(3):
        x = x @ ws[i] + bs[i]
        x = x + embs[i][t]
        x = jnp.maximum(x, 0.0)
    return x @ p["w4"] + p["b4"]


if __name__ == "__main__":
    key = jax.random.PRNGKey(0)
    k_param, k_x, k_t = jax.random.split(key, 3)

    params = init_params(k_param)

    # Small primary example.
    B = 16
    x_0 = jax.random.normal(k_x, (B, IN_DIM), jnp.float32)
    t = jax.random.randint(k_t, (B,), 0, N_STEPS, jnp.int32)
    ref = reference_forward(x_0, t, params)

    # Exact f32 path: must match the reference tightly.
    out_f32 = jax.block_until_ready(
        mlp_diffusion_forward(x_0, t, params, weight_dtype=jnp.float32))
    assert out_f32.shape == (B, IN_DIM)
    assert jnp.allclose(out_f32, ref, atol=1e-5, rtol=1e-5), "f32 kernel mismatch vs reference"

    # Default bf16 MXU path (f32 accumulation): looser tolerance.
    out_bf16 = jax.block_until_ready(mlp_diffusion_forward(x_0, t, params))
    assert out_bf16.shape == (B, IN_DIM)
    assert jnp.allclose(out_bf16, ref, atol=5e-2, rtol=5e-2), "bf16 kernel mismatch"

    # Uneven, multi-tile batch to exercise padding + grid > 1 (exact f32 check).
    B2 = 300
    x2 = jax.random.normal(k_x, (B2, IN_DIM), jnp.float32)
    t2 = jax.random.randint(k_t, (B2,), 0, N_STEPS, jnp.int32)
    out2 = jax.block_until_ready(
        mlp_diffusion_forward(x2, t2, params, block_b=128, weight_dtype=jnp.float32))
    ref2 = reference_forward(x2, t2, params)
    assert jnp.allclose(out2, ref2, atol=1e-5, rtol=1e-5), "padded-batch kernel mismatch"

    # Larger batch exercising the >=2-grid-step split (v7x dual-TC path), bf16 default.
    B3 = 1200
    x3 = jax.random.normal(k_x, (B3, IN_DIM), jnp.float32)
    t3 = jax.random.randint(k_t, (B3,), 0, N_STEPS, jnp.int32)
    out3 = jax.block_until_ready(mlp_diffusion_forward(x3, t3, params))
    ref3 = reference_forward(x3, t3, params)
    assert out3.shape == (B3, IN_DIM)
    assert jnp.allclose(out3, ref3, atol=5e-2, rtol=5e-2), "large-batch bf16 kernel mismatch"

    print("KERNEL_OK")
</pallas_src>

<mosaic_0001>
module attributes {stable_mosaic.version = 11 : i64} {
  func.func @mlp_diffusion_kernel(%arg0: i32, %arg1: memref<16x2xf32, #tpu.memory_space<vmem>>, %arg2: memref<16x1xi32, #tpu.memory_space<vmem>>, %arg3: memref<2x128xf32, #tpu.memory_space<vmem>>, %arg4: memref<16x384xf32, #tpu.memory_space<vmem>>, %arg5: memref<128x128xf32, #tpu.memory_space<vmem>>, %arg6: memref<128x128xf32, #tpu.memory_space<vmem>>, %arg7: memref<128x2xf32, #tpu.memory_space<vmem>>, %arg8: memref<1x2xf32, #tpu.memory_space<vmem>>, %arg9: memref<16x2xf32, #tpu.memory_space<vmem>>) attributes {dimension_semantics = [#tpu.dimension_semantics<parallel>], iteration_bounds = array<i64: 1>, scalar_prefetch = 0 : i64, scratch_operands = 0 : i64, tpu.core_type = #tpu.core_type<tc>, window_params = [{transform_indices = @transform_0, window_bounds = array<i64: 16, 2>}, {transform_indices = @transform_1, window_bounds = array<i64: 16, 1>}, {pipeline_mode = #tpu.pipeline_mode<synchronous>, transform_indices = @transform_2, window_bounds = array<i64: 2, 128>}, {pipeline_mode = #tpu.pipeline_mode<synchronous>, transform_indices = @transform_3, window_bounds = array<i64: 16, 384>}, {pipeline_mode = #tpu.pipeline_mode<synchronous>, transform_indices = @transform_4, window_bounds = array<i64: 128, 128>}, {pipeline_mode = #tpu.pipeline_mode<synchronous>, transform_indices = @transform_5, window_bounds = array<i64: 128, 128>}, {pipeline_mode = #tpu.pipeline_mode<synchronous>, transform_indices = @transform_6, window_bounds = array<i64: 128, 2>}, {pipeline_mode = #tpu.pipeline_mode<synchronous>, transform_indices = @transform_7, window_bounds = array<i64: 1, 2>}, {transform_indices = @transform_8, window_bounds = array<i64: 16, 2>}]} {
    %c0 = arith.constant 0 : index
    %c0_0 = arith.constant 0 : index
    %0 = vector.load %arg1[%c0, %c0_0] : memref<16x2xf32, #tpu.memory_space<vmem>>, vector<16x2xf32>
    %c0_1 = arith.constant 0 : index
    %c0_2 = arith.constant 0 : index
    %1 = vector.load %arg2[%c0_1, %c0_2] : memref<16x1xi32, #tpu.memory_space<vmem>>, vector<16x1xi32>
    %2 = tpu.iota {dimensions = array<i32: 1>} : vector<16x16xi32>
    %3 = vector.broadcast %1 : vector<16x1xi32> to vector<16x16xi32>
    %4 = arith.cmpi eq, %2, %3 : vector<16x16xi32>
    %5 = arith.extui %4 : vector<16x16xi1> to vector<16x16xi32>
    %6 = arith.sitofp %5 : vector<16x16xi32> to vector<16x16xf32>
    %c0_3 = arith.constant 0 : index
    %c0_4 = arith.constant 0 : index
    %7 = vector.load %arg4[%c0_3, %c0_4] : memref<16x384xf32, #tpu.memory_space<vmem>>, vector<16x384xf32>
    %cst = arith.constant dense<0.000000e+00> : vector<16x384xf32>
    %8 = tpu.matmul %6, %7, %cst {dimension_numbers = #tpu.dot_dimension_numbers<[1], [0], [0], [1], [0, 0, 1, 1], [], []>} : vector<16x16xf32>, vector<16x384xf32>, vector<16x384xf32> -> vector<16x384xf32>
    %9 = vector.extract_strided_slice %8 {offsets = [0, 0], sizes = [16, 128], strides = [1, 1]} : vector<16x384xf32> to vector<16x128xf32>
    %10 = vector.extract_strided_slice %8 {offsets = [0, 128], sizes = [16, 128], strides = [1, 1]} : vector<16x384xf32> to vector<16x128xf32>
    %11 = vector.extract_strided_slice %8 {offsets = [0, 256], sizes = [16, 128], strides = [1, 1]} : vector<16x384xf32> to vector<16x128xf32>
    %c0_5 = arith.constant 0 : index
    %c0_6 = arith.constant 0 : index
    %12 = vector.load %arg3[%c0_5, %c0_6] : memref<2x128xf32, #tpu.memory_space<vmem>>, vector<2x128xf32>
    %13 = vector.extract_strided_slice %0 {offsets = [0, 0], sizes = [16, 1], strides = [1, 1]} : vector<16x2xf32> to vector<16x1xf32>
    %14 = vector.extract_strided_slice %12 {offsets = [0, 0], sizes = [1, 128], strides = [1, 1]} : vector<2x128xf32> to vector<1x128xf32>
    %15 = vector.broadcast %13 : vector<16x1xf32> to vector<16x128xf32>
    %16 = vector.broadcast %14 : vector<1x128xf32> to vector<16x128xf32>
    %17 = arith.mulf %15, %16 : vector<16x128xf32>
    %18 = vector.extract_strided_slice %0 {offsets = [0, 1], sizes = [16, 1], strides = [1, 1]} : vector<16x2xf32> to vector<16x1xf32>
    %19 = vector.extract_strided_slice %12 {offsets = [1, 0], sizes = [1, 128], strides = [1, 1]} : vector<2x128xf32> to vector<1x128xf32>
    %20 = vector.broadcast %18 : vector<16x1xf32> to vector<16x128xf32>
    %21 = vector.broadcast %19 : vector<1x128xf32> to vector<16x128xf32>
    %22 = arith.mulf %20, %21 : vector<16x128xf32>
    %23 = arith.addf %17, %22 : vector<16x128xf32>
    %24 = arith.addf %23, %9 : vector<16x128xf32>
    %cst_7 = arith.constant 0.000000e+00 : f32
    %25 = vector.broadcast %cst_7 : f32 to vector<16x128xf32>
    %26 = arith.maximumf %24, %25 : vector<16x128xf32>
    %c0_8 = arith.constant 0 : index
    %c0_9 = arith.constant 0 : index
    %27 = vector.load %arg5[%c0_8, %c0_9] : memref<128x128xf32, #tpu.memory_space<vmem>>, vector<128x128xf32>
    %cst_10 = arith.constant dense<0.000000e+00> : vector<16x128xf32>
    %28 = tpu.matmul %26, %27, %cst_10 {dimension_numbers = #tpu.dot_dimension_numbers<[1], [0], [0], [1], [0, 0, 1, 1], [], []>} : vector<16x128xf32>, vector<128x128xf32>, vector<16x128xf32> -> vector<16x128xf32>
    %29 = arith.addf %28, %10 : vector<16x128xf32>
    %cst_11 = arith.constant 0.000000e+00 : f32
    %30 = vector.broadcast %cst_11 : f32 to vector<16x128xf32>
    %31 = arith.maximumf %29, %30 : vector<16x128xf32>
    %c0_12 = arith.constant 0 : index
    %c0_13 = arith.constant 0 : index
    %32 = vector.load %arg6[%c0_12, %c0_13] : memref<128x128xf32, #tpu.memory_space<vmem>>, vector<128x128xf32>
    %cst_14 = arith.constant dense<0.000000e+00> : vector<16x128xf32>
    %33 = tpu.matmul %31, %32, %cst_14 {dimension_numbers = #tpu.dot_dimension_numbers<[1], [0], [0], [1], [0, 0, 1, 1], [], []>} : vector<16x128xf32>, vector<128x128xf32>, vector<16x128xf32> -> vector<16x128xf32>
    %34 = arith.addf %33, %11 : vector<16x128xf32>
    %cst_15 = arith.constant 0.000000e+00 : f32
    %35 = vector.broadcast %cst_15 : f32 to vector<16x128xf32>
    %36 = arith.maximumf %34, %35 : vector<16x128xf32>
    %c0_16 = arith.constant 0 : index
    %c0_17 = arith.constant 0 : index
    %37 = vector.load %arg7[%c0_16, %c0_17] : memref<128x2xf32, #tpu.memory_space<vmem>>, vector<128x2xf32>
    %cst_18 = arith.constant dense<0.000000e+00> : vector<16x2xf32>
    %38 = tpu.matmul %36, %37, %cst_18 {dimension_numbers = #tpu.dot_dimension_numbers<[1], [0], [0], [1], [0, 0, 1, 1], [], []>} : vector<16x128xf32>, vector<128x2xf32>, vector<16x2xf32> -> vector<16x2xf32>
    %c0_19 = arith.constant 0 : index
    %c0_20 = arith.constant 0 : index
    %39 = vector.load %arg8[%c0_19, %c0_20] : memref<1x2xf32, #tpu.memory_space<vmem>>, vector<1x2xf32>
    %40 = vector.broadcast %39 : vector<1x2xf32> to vector<16x2xf32>
    %41 = arith.addf %38, %40 : vector<16x2xf32>
    %c0_21 = arith.constant 0 : index
    %c0_22 = arith.constant 0 : index
    %42 = vector.load %arg9[%c0_21, %c0_22] : memref<16x2xf32, #tpu.memory_space<vmem>>, vector<16x2xf32>
    tpu.vector_store %arg9[%c0_21, %c0_22], %41 {strides = array<i32>} : memref<16x2xf32, #tpu.memory_space<vmem>>, vector<16x2xf32>,
    return
  }
  func.func @transform_0(%arg0: i32) -> (i32, i32) {
    %c0_i32 = arith.constant 0 : i32
    %c0_i32_0 = arith.constant 0 : i32
    return %arg0, %c0_i32 : i32, i32
  }
  func.func @transform_1(%arg0: i32) -> (i32, i32) {
    %c0_i32 = arith.constant 0 : i32
    %c0_i32_0 = arith.constant 0 : i32
    return %arg0, %c0_i32 : i32, i32
  }
  func.func @transform_2(%arg0: i32) -> (i32, i32) {
    %c0_i32 = arith.constant 0 : i32
    %c0_i32_0 = arith.constant 0 : i32
    %c0_i32_1 = arith.constant 0 : i32
    return %c0_i32, %c0_i32_0 : i32, i32
  }
  func.func @transform_3(%arg0: i32) -> (i32, i32) {
    %c0_i32 = arith.constant 0 : i32
    %c0_i32_0 = arith.constant 0 : i32
    %c0_i32_1 = arith.constant 0 : i32
    return %c0_i32, %c0_i32_0 : i32, i32
  }
  func.func @transform_4(%arg0: i32) -> (i32, i32) {
    %c0_i32 = arith.constant 0 : i32
    %c0_i32_0 = arith.constant 0 : i32
    %c0_i32_1 = arith.constant 0 : i32
    return %c0_i32, %c0_i32_0 : i32, i32
  }
  func.func @transform_5(%arg0: i32) -> (i32, i32) {
    %c0_i32 = arith.constant 0 : i32
    %c0_i32_0 = arith.constant 0 : i32
    %c0_i32_1 = arith.constant 0 : i32
    return %c0_i32, %c0_i32_0 : i32, i32
  }
  func.func @transform_6(%arg0: i32) -> (i32, i32) {
    %c0_i32 = arith.constant 0 : i32
    %c0_i32_0 = arith.constant 0 : i32
    %c0_i32_1 = arith.constant 0 : i32
    return %c0_i32, %c0_i32_0 : i32, i32
  }
  func.func @transform_7(%arg0: i32) -> (i32, i32) {
    %c0_i32 = arith.constant 0 : i32
    %c0_i32_0 = arith.constant 0 : i32
    %c0_i32_1 = arith.constant 0 : i32
    return %c0_i32, %c0_i32_0 : i32, i32
  }
  func.func @transform_8(%arg0: i32) -> (i32, i32) {
    %c0_i32 = arith.constant 0 : i32
    %c0_i32_0 = arith.constant 0 : i32
    return %arg0, %c0_i32 : i32, i32
  }
}

</mosaic_0001>

<llo_original>
// kernel: mlp_diffusion_forward.1
$region0: #{mlp_diffusion_forward.1}
  #allocation0 [shape = 'u32[]', space=smem, size = 0x4, offset = 0x4, fixed_abs, tag = 'smem constant byte address 0x4 - core index']
  #allocation1 [shape = 'u32[72,128]{1,0:T(1,128)}', space=vmem, size = 0x9000, scoped, tag = 'internal scratch']
  %s0 = inlined_call_operand.vmem [shape: f32[16,2], index: 0, kind: input, shape index: {}]
  %s1 = inlined_call_operand.vmem [shape: s32[16,1], index: 1, kind: input, shape index: {}]
  %s2 = inlined_call_operand.vmem [shape: f32[2,128], index: 2, kind: input, shape index: {}]
  %s3 = inlined_call_operand.vmem [shape: f32[16,384], index: 3, kind: input, shape index: {}]
  %s4 = inlined_call_operand.vmem [shape: f32[128,128], index: 4, kind: input, shape index: {}]
  %s5 = inlined_call_operand.vmem [shape: f32[128,128], index: 5, kind: input, shape index: {}]
  %s6 = inlined_call_operand.vmem [shape: f32[128,2], index: 6, kind: input, shape index: {}]
  %s7 = inlined_call_operand.vmem [shape: f32[1,2], index: 7, kind: input, shape index: {}]
  %s8 = inlined_call_operand.vmem [shape: f32[16,2], index: 8, kind: output, shape index: {}]
  %s9 = sld [smem:[#allocation0]]
  $region42: #{mlp_diffusion_forward.1} parent=0
    _
  %s11 = ssub.s32 1, %s9
  %s12 = scalar_select 0, %s11, %s9
  // Predicated region
  $region2: #{mlp_diffusion_forward.1} parent=0 // pred_check
    _
  $region3: #{mlp_diffusion_forward.1} parent=0 // pred_check_branch
    %14 = sbr.rel (0) target = $region5
  $region4: #{mlp_diffusion_forward.1} parent=0 // pred_region
    _
  $region5: #{mlp_diffusion_forward.1} parent=0 // pred_fallthru
    _
  // Predicated region
  $region6: #{mlp_diffusion_forward.1} parent=0 // pred_check
    _
  $region7: #{mlp_diffusion_forward.1} parent=0 // pred_check_branch
    %16 = sbr.rel (0) target = $region9
  $region8: #{mlp_diffusion_forward.1} parent=0 // pred_region
    _
  $region9: #{mlp_diffusion_forward.1} parent=0 // pred_fallthru
    _
  // Predicated region
  $region10: #{mlp_diffusion_forward.1} parent=0 // pred_check
    _
  $region11: #{mlp_diffusion_forward.1} parent=0 // pred_check_branch
    %18 = sbr.rel (0) target = $region13
  $region12: #{mlp_diffusion_forward.1} parent=0 // pred_region
    _
  $region13: #{mlp_diffusion_forward.1} parent=0 // pred_fallthru
    _
  // Predicated region
  $region14: #{mlp_diffusion_forward.1} parent=0 // pred_check
    _
  $region15: #{mlp_diffusion_forward.1} parent=0 // pred_check_branch
    %20 = sbr.rel (0) target = $region17
  $region16: #{mlp_diffusion_forward.1} parent=0 // pred_region
    _
  $region17: #{mlp_diffusion_forward.1} parent=0 // pred_fallthru
    _
  // Predicated region
  $region18: #{mlp_diffusion_forward.1} parent=0 // pred_check
    _
  $region19: #{mlp_diffusion_forward.1} parent=0 // pred_check_branch
    %22 = sbr.rel (0) target = $region21
  $region20: #{mlp_diffusion_forward.1} parent=0 // pred_region
    _
  $region21: #{mlp_diffusion_forward.1} parent=0 // pred_fallthru
    _
  // Predicated region
  $region22: #{mlp_diffusion_forward.1} parent=0 // pred_check
    _
  $region23: #{mlp_diffusion_forward.1} parent=0 // pred_check_branch
    %24 = sbr.rel (0) target = $region25
  $region24: #{mlp_diffusion_forward.1} parent=0 // pred_region
    _
  $region25: #{mlp_diffusion_forward.1} parent=0 // pred_fallthru
    _
  // Predicated region
  $region26: #{mlp_diffusion_forward.1} parent=0 // pred_check
    _
  $region27: #{mlp_diffusion_forward.1} parent=0 // pred_check_branch
    %26 = sbr.rel (0) target = $region29
  $region28: #{mlp_diffusion_forward.1} parent=0 // pred_region
    _
  $region29: #{mlp_diffusion_forward.1} parent=0 // pred_fallthru
    _
  // Predicated region
  $region30: #{mlp_diffusion_forward.1} parent=0 // pred_check
    _
  $region31: #{mlp_diffusion_forward.1} parent=0 // pred_check_branch
    %28 = sbr.rel (0) target = $region33
  $region32: #{mlp_diffusion_forward.1} parent=0 // pred_region
    _
  $region33: #{mlp_diffusion_forward.1} parent=0 // pred_fallthru
    _
  %v29 = vld [vmem:[%s0] sm:$0xff]
  %v30 = vld [vmem:[%s0 + $0x8] sm:$0xff]
  %v31 = vld [vmem:[%s1] sm:$0xff]
  %v32 = vld [vmem:[%s1 + $0x8] sm:$0xff]
  %v33 = vlaneseq
  %v34 = vand.u32 %v33, 127
  %35 = vset.pattern.permute.xlu0 0
  %36 = vperm.xlu0 %35, %v31
  %v37 = vpop.permute.xlu0 %36
  %38 = vset.pattern.permute.xlu0 0
  %39 = vperm.xlu0 %38, %v32
  %v40 = vpop.permute.xlu0 %39
  %vm41 = vcmp.eq.s32.totalorder %v34, %v37
  %vm42 = vcmp.eq.s32.totalorder %v34, %v40
  %v43 = vsel %vm41, 1, 0
  %v44 = vsel %vm42, 1, 0
  %v45 = vcvt.s32.f32 %v43
  %v46 = vcvt.s32.f32 %v44
  %v47 = vld [vmem:[%s3] sm:$0xff]
  %v48 = vld [vmem:[%s3 + $0x8] sm:$0xff]
  %v49 = vld [vmem:[%s3 + $0x10] sm:$0xff]
  %v50 = vld [vmem:[%s3 + $0x18] sm:$0xff]
  %v51 = vld [vmem:[%s3 + $0x20] sm:$0xff]
  %v52 = vld [vmem:[%s3 + $0x28] sm:$0xff]
  %vm53 = vcmask 130048
  %v55 = vsel %vm53, %v45, 0
  %v58 = vsel %vm53, %v46, 0
  %60 = vmatpush.msra.mxu0 0.0
  %61 = vmatpush.msra.mxu0 0.0
  %62 = vmatpush.msra.mxu0 0.0
  %63 = vmatpush.msra.mxu0 0.0
  %64 = vmatpush.msra.mxu0 0.0
  %65 = vmatpush.msra.mxu0 0.0
  %66 = vmatpush.msra.mxu0 0.0
  %67 = vmatpush.msra.mxu0 0.0
  %68 = vmatpush.msra.mxu0 0.0
  %69 = vmatpush.msra.mxu0 0.0
  %70 = vmatpush.msra.mxu0 0.0
  %71 = vmatpush.msra.mxu0 0.0
  %72 = vmatpush.msra.mxu0 0.0
  %73 = vmatpush.msra.mxu0 0.0
  %74 = vmatpush.msra.mxu0 %v50
  %75 = vmatpush.msra.mxu0 %v47
  %76 = vmatmul.f32.gmra.mxu0 %v55
  %v77 = vpop.f32.mrf.mxu0
  %v78 = vadd.f32 0.0, %v77
  %79 = vmatmul.f32.gmra.mxu0 %v58
  %v80 = vpop.f32.mrf.mxu0
  %v81 = vadd.f32 0.0, %v80
  %82 = vdwg.mxu0
  %83 = vmatpush.msra.mxu0 0.0
  %84 = vmatpush.msra.mxu0 0.0
  %85 = vmatpush.msra.mxu0 0.0
  %86 = vmatpush.msra.mxu0 0.0
  %87 = vmatpush.msra.mxu0 0.0
  %88 = vmatpush.msra.mxu0 0.0
  %89 = vmatpush.msra.mxu0 0.0
  %90 = vmatpush.msra.mxu0 0.0
  %91 = vmatpush.msra.mxu0 0.0
  %92 = vmatpush.msra.mxu0 0.0
  %93 = vmatpush.msra.mxu0 0.0
  %94 = vmatpush.msra.mxu0 0.0
  %95 = vmatpush.msra.mxu0 0.0
  %96 = vmatpush.msra.mxu0 0.0
  %97 = vmatpush.msra.mxu0 %v51
  %98 = vmatpush.msra.mxu0 %v48
  %99 = vmatmul.f32.gmra.mxu0 %v55
  %v100 = vpop.f32.mrf.mxu0
  %v101 = vadd.f32 0.0, %v100
  %102 = vmatmul.f32.gmra.mxu0 %v58
  %v103 = vpop.f32.mrf.mxu0
  %v104 = vadd.f32 0.0, %v103
  %105 = vdwg.mxu0
  %106 = vmatpush.msra.mxu0 0.0
  %107 = vmatpush.msra.mxu0 0.0
  %108 = vmatpush.msra.mxu0 0.0
  %109 = vmatpush.msra.mxu0 0.0
  %110 = vmatpush.msra.mxu0 0.0
  %111 = vmatpush.msra.mxu0 0.0
  %112 = vmatpush.msra.mxu0 0.0
  %113 = vmatpush.msra.mxu0 0.0
  %114 = vmatpush.msra.mxu0 0.0
  %115 = vmatpush.msra.mxu0 0.0
  %116 = vmatpush.msra.mxu0 0.0
  %117 = vmatpush.msra.mxu0 0.0
  %118 = vmatpush.msra.mxu0 0.0
  %119 = vmatpush.msra.mxu0 0.0
  %120 = vmatpush.msra.mxu0 %v52
  %121 = vmatpush.msra.mxu0 %v49
  %122 = vmatmul.f32.gmra.mxu0 %v55
  %v123 = vpop.f32.mrf.mxu0
  %v124 = vadd.f32 0.0, %v123
  %125 = vmatmul.f32.gmra.mxu0 %v58
  %v126 = vpop.f32.mrf.mxu0
  %v127 = vadd.f32 0.0, %v126
  %128 = vdwg.mxu0
  %v129 = vld [vmem:[%s2] sm:$0x3]
  %131 = vset.pattern.permute.xlu0 0
  %132 = vperm.xlu0 %131, %v29
  %v133 = vpop.permute.xlu0 %132
  %136 = vset.pattern.permute.xlu0 0
  %137 = vperm.xlu0 %136, %v30
  %v138 = vpop.permute.xlu0 %137
  %v140 = vperm.slane %v129, 0
  %v141 = vmul.f32 %v133, %v140
  %v142 = vmul.f32 %v138, %v140
  %143 = vset.pattern.permute.xlu0 1
  %144 = vperm.xlu0 %143, %v29
  %v145 = vpop.permute.xlu0 %144
  %147 = vset.pattern.permute.xlu0 1
  %148 = vperm.xlu0 %147, %v30
  %v149 = vpop.permute.xlu0 %148
  %v151 = vperm.slane %v129, 1
  %v152 = vmul.f32 %v145, %v151
  %v153 = vmul.f32 %v149, %v151
  %v154 = vadd.f32 %v141, %v152
  %v155 = vadd.f32 %v142, %v153
  %v156 = vadd.f32 %v154, %v78
  %v157 = vadd.f32 %v155, %v81
  %v158 = vmax.f32 %v156, 0.0
  %v159 = vmax.f32 %v157, 0.0
  %v160 = vld [vmem:[%s4] sm:$0xff]
  %v161 = vld [vmem:[%s4 + $0x8] sm:$0xff]
  %v162 = vld [vmem:[%s4 + $0x10] sm:$0xff]
  %v163 = vld [vmem:[%s4 + $0x18] sm:$0xff]
  %v164 = vld [vmem:[%s4 + $0x20] sm:$0xff]
  %v165 = vld [vmem:[%s4 + $0x28] sm:$0xff]
  %v166 = vld [vmem:[%s4 + $0x30] sm:$0xff]
  %v167 = vld [vmem:[%s4 + $0x38] sm:$0xff]
  %v168 = vld [vmem:[%s4 + $0x40] sm:$0xff]
  %v169 = vld [vmem:[%s4 + $0x48] sm:$0xff]
  %v170 = vld [vmem:[%s4 + $0x50] sm:$0xff]
  %v171 = vld [vmem:[%s4 + $0x58] sm:$0xff]
  %v172 = vld [vmem:[%s4 + $0x60] sm:$0xff]
  %v173 = vld [vmem:[%s4 + $0x68] sm:$0xff]
  %v174 = vld [vmem:[%s4 + $0x70] sm:$0xff]
  %v175 = vld [vmem:[%s4 + $0x78] sm:$0xff]
  %176 = vmatpush.msra.mxu0 %v175
  %177 = vmatpush.msra.mxu0 %v174
  %178 = vmatpush.msra.mxu0 %v173
  %179 = vmatpush.msra.mxu0 %v172
  %180 = vmatpush.msra.mxu0 %v171
  %181 = vmatpush.msra.mxu0 %v170
  %182 = vmatpush.msra.mxu0 %v169
  %183 = vmatpush.msra.mxu0 %v168
  %184 = vmatpush.msra.mxu0 %v167
  %185 = vmatpush.msra.mxu0 %v166
  %186 = vmatpush.msra.mxu0 %v165
  %187 = vmatpush.msra.mxu0 %v164
  %188 = vmatpush.msra.mxu0 %v163
  %189 = vmatpush.msra.mxu0 %v162
  %190 = vmatpush.msra.mxu0 %v161
  %191 = vmatpush.msra.mxu0 %v160
  %192 = vmatmul.f32.gmra.mxu0 %v158
  %v193 = vpop.f32.mrf.mxu0
  %v194 = vadd.f32 %v101, %v193
  %195 = vmatmul.f32.gmra.mxu0 %v159
  %v196 = vpop.f32.mrf.mxu0
  %v197 = vadd.f32 %v104, %v196
  %198 = vdwg.mxu0
  %v199 = vmax.f32 %v194, 0.0
  %v200 = vmax.f32 %v197, 0.0
  %v201 = vld [vmem:[%s5] sm:$0xff]
  %v202 = vld [vmem:[%s5 + $0x8] sm:$0xff]
  %v203 = vld [vmem:[%s5 + $0x10] sm:$0xff]
  %v204 = vld [vmem:[%s5 + $0x18] sm:$0xff]
  %v205 = vld [vmem:[%s5 + $0x20] sm:$0xff]
  %v206 = vld [vmem:[%s5 + $0x28] sm:$0xff]
  %v207 = vld [vmem:[%s5 + $0x30] sm:$0xff]
  %v208 = vld [vmem:[%s5 + $0x38] sm:$0xff]
  %v209 = vld [vmem:[%s5 + $0x40] sm:$0xff]
  %v210 = vld [vmem:[%s5 + $0x48] sm:$0xff]
  %v211 = vld [vmem:[%s5 + $0x50] sm:$0xff]
  %v212 = vld [vmem:[%s5 + $0x58] sm:$0xff]
  %v213 = vld [vmem:[%s5 + $0x60] sm:$0xff]
  %v214 = vld [vmem:[%s5 + $0x68] sm:$0xff]
  %v215 = vld [vmem:[%s5 + $0x70] sm:$0xff]
  %v216 = vld [vmem:[%s5 + $0x78] sm:$0xff]
  %217 = vmatpush.msra.mxu0 %v216
  %218 = vmatpush.msra.mxu0 %v215
  %219 = vmatpush.msra.mxu0 %v214
  %220 = vmatpush.msra.mxu0 %v213
  %221 = vmatpush.msra.mxu0 %v212
  %222 = vmatpush.msra.mxu0 %v211
  %223 = vmatpush.msra.mxu0 %v210
  %224 = vmatpush.msra.mxu0 %v209
  %225 = vmatpush.msra.mxu0 %v208
  %226 = vmatpush.msra.mxu0 %v207
  %227 = vmatpush.msra.mxu0 %v206
  %228 = vmatpush.msra.mxu0 %v205
  %229 = vmatpush.msra.mxu0 %v204
  %230 = vmatpush.msra.mxu0 %v203
  %231 = vmatpush.msra.mxu0 %v202
  %232 = vmatpush.msra.mxu0 %v201
  %233 = vmatmul.f32.gmra.mxu0 %v199
  %v234 = vpop.f32.mrf.mxu0
  %v235 = vadd.f32 %v124, %v234
  %236 = vmatmul.f32.gmra.mxu0 %v200
  %v237 = vpop.f32.mrf.mxu0
  %v238 = vadd.f32 %v127, %v237
  %239 = vdwg.mxu0
  %v240 = vmax.f32 %v235, 0.0
  %v241 = vmax.f32 %v238, 0.0
  %v242 = vld [vmem:[%s6] sm:$0xff]
  %v243 = vld [vmem:[%s6 + $0x8] sm:$0xff]
  %v244 = vld [vmem:[%s6 + $0x10] sm:$0xff]
  %v245 = vld [vmem:[%s6 + $0x18] sm:$0xff]
  %v246 = vld [vmem:[%s6 + $0x20] sm:$0xff]
  %v247 = vld [vmem:[%s6 + $0x28] sm:$0xff]
  %v248 = vld [vmem:[%s6 + $0x30] sm:$0xff]
  %v249 = vld [vmem:[%s6 + $0x38] sm:$0xff]
  %v250 = vld [vmem:[%s6 + $0x40] sm:$0xff]
  %v251 = vld [vmem:[%s6 + $0x48] sm:$0xff]
  %v252 = vld [vmem:[%s6 + $0x50] sm:$0xff]
  %v253 = vld [vmem:[%s6 + $0x58] sm:$0xff]
  %v254 = vld [vmem:[%s6 + $0x60] sm:$0xff]
  %v255 = vld [vmem:[%s6 + $0x68] sm:$0xff]
  %v256 = vld [vmem:[%s6 + $0x70] sm:$0xff]
  %v257 = vld [vmem:[%s6 + $0x78] sm:$0xff]
  %v258 = vld [vmem:[%s7] sm:$0x1]
  %v260 = vperm.slane %v258, 0
  %262 = vmatpush.msra.mxu0 %v257
  %263 = vmatpush.msra.mxu0 %v256
  %264 = vmatpush.msra.mxu0 %v255
  %265 = vmatpush.msra.mxu0 %v254
  %266 = vmatpush.msra.mxu0 %v253
  %267 = vmatpush.msra.mxu0 %v252
  %268 = vmatpush.msra.mxu0 %v251
  %269 = vmatpush.msra.mxu0 %v250
  %270 = vmatpush.msra.mxu0 %v249
  %271 = vmatpush.msra.mxu0 %v248
  %272 = vmatpush.msra.mxu0 %v247
  %273 = vmatpush.msra.mxu0 %v246
  %274 = vmatpush.msra.mxu0 %v245
  %275 = vmatpush.msra.mxu0 %v244
  %276 = vmatpush.msra.mxu0 %v243
  %277 = vmatpush.msra.mxu0 %v242
  %278 = vmatmul.f32.gmra.mxu0 %v240
  %v279 = vpop.f32.mrf.mxu0
  %v280 = vadd.f32 %v260, %v279
  %281 = vmatmul.f32.gmra.mxu0 %v241
  %v282 = vpop.f32.mrf.mxu0
  %v283 = vadd.f32 %v260, %v282
  %284 = vdwg.mxu0
  %vm285 = vcmask 15360
  %286 = vst.msk [vmem:[%s8] sm:$0xff] %vm285, %v280
  %287 = vst.msk [vmem:[%s8 + $0x8] sm:$0xff] %vm285, %v283
  // Predicated region
  $region34: #{mlp_diffusion_forward.1} parent=0 // pred_check
    _
  $region35: #{mlp_diffusion_forward.1} parent=0 // pred_check_branch
    %289 = sbr.rel (0) target = $region37
  $region36: #{mlp_diffusion_forward.1} parent=0 // pred_region
    _
  $region37: #{mlp_diffusion_forward.1} parent=0 // pred_fallthru
    _
  // Predicated region
  $region38: #{mlp_diffusion_forward.1} parent=0 // pred_check
    _
  $region39: #{mlp_diffusion_forward.1} parent=0 // pred_check_branch
    %291 = sbr.rel (0) target = $region41
  $region40: #{mlp_diffusion_forward.1} parent=0 // pred_region
    _
  $region41: #{mlp_diffusion_forward.1} parent=0 // pred_fallthru
    _

</llo_original>
